<compile_context>
chip_gen: v7x
topology: tpu7x:2x2x1
jax: 0.10.0
libtpu: 0.0.40
codegen_flags: <defaults>
</compile_context>

<pallas_src>
import jax
import jax.numpy as jnp
from jax import lax
from jax.experimental import pallas as pl
from jax.experimental.pallas import tpu as pltpu

# Module hyper-params (from nn.Conv2d(16, 64, 3, 1, 1, bias=False, groups=16))
C_IN = 16
C_OUT = 64
GROUPS = 16
KH = KW = 3
NTAPS = KH * KW              # 9
OC_PER_IC = C_OUT // GROUPS  # 4


def _grouped_conv_relu_kernel(x_ref, w_ref, o_ref):
    # x_ref: (1, 9, H, L)   pre-shifted input windows for one batch; lane = w*16 + g
    # w_ref: (4, 9, H, L)   pre-broadcast weight planes (f32, VMEM-resident)
    # o_ref: (1, 4, H, L)   lane-dense output slabs
    #
    # Every load below is a whole (H, L) plane starting at sublane 0 / lane 0:
    # pure aligned vld + VALU mul/add, no XLU relayout, no sublane broadcasts.
    wins = [x_ref[0, t].astype(jnp.float32) for t in range(NTAPS)]   # j-invariant
    for j in range(OC_PER_IC):
        # Two partial accumulators -> more independent work for the 4 VALU slots
        # (no f32 FMA on the VPU; mul+add are separate ops).
        acc0 = wins[0] * w_ref[j, 0]
        acc1 = wins[1] * w_ref[j, 1]
        for t in range(2, NTAPS):
            term = wins[t] * w_ref[j, t]
            if t % 2 == 0:
                acc0 = acc0 + term
            else:
                acc1 = acc1 + term
        # Fused ReLU; (H, 256) store -> unmasked, lane-dense.
        o_ref[0, j] = jnp.maximum(acc0 + acc1, 0.0).astype(o_ref.dtype)


def demo_forward(x, weight):
    """x: (N, 16, H, W), weight: (64, 1, 3, 3). Returns relu(grouped_conv(x)), NCHW."""
    N, C, H, W = x.shape
    assert C == C_IN
    assert weight.shape == (C_OUT, 1, KH, KW)
    L = W * C_IN

    # ---- wrapper-side layout plumbing (input) ------------------------------
    # NCHW -> NHWC, zero-pad H/W by 1, then materialize the 9 (kh, kw)-shifted
    # copies with the trailing (W, C_IN) dims flattened so the lane axis is
    # (w, in_channel).  All shifts land at lane 0 / sublane 0 inside the kernel.
    x_nhwc = jnp.transpose(x, (0, 2, 3, 1))                      # (N, H, W, 16)
    x_pad = jnp.pad(x_nhwc, ((0, 0), (1, 1), (1, 1), (0, 0)))    # (N, H+2, W+2, 16)
    shifts = [
        x_pad[:, kh:kh + H, kw:kw + W, :].reshape(N, H, L)
        for kh in range(KH) for kw in range(KW)
    ]
    x_shift = jnp.stack(shifts, axis=1)                          # (N, 9, H, L)

    # ---- wrapper-side layout plumbing (weights) ----------------------------
    # weight[g*4 + j, 0, kh, kw] -> per-(j, tap) lane vector of length W*C_IN
    # (the 16 per-group taps tiled across the W output positions), then
    # pre-broadcast across the H sublanes so the kernel does zero broadcast work.
    w_g = weight.reshape(GROUPS, OC_PER_IC, KH, KW)                         # [g, j, kh, kw]
    w_t = jnp.transpose(w_g, (1, 2, 3, 0)).reshape(OC_PER_IC, NTAPS, GROUPS)
    w_lanes = jnp.tile(w_t, (1, 1, W))                                      # (4, 9, L)
    w_bcast = jnp.broadcast_to(
        w_lanes[:, :, None, :].astype(jnp.float32), (OC_PER_IC, NTAPS, H, L))

    out_slab = pl.pallas_call(
        _grouped_conv_relu_kernel,
        out_shape=jax.ShapeDtypeStruct((N, OC_PER_IC, H, L), x.dtype),
        grid_spec=pltpu.PrefetchScalarGridSpec(
            num_scalar_prefetch=0,
            grid=(N,),
            in_specs=[
                # One stack of 9 pre-shifted planes per batch.
                pl.BlockSpec((1, NTAPS, H, L), lambda n: (n, 0, 0, 0)),
                # Constant index_map -> weight table DMA'd once, stays resident.
                pl.BlockSpec((OC_PER_IC, NTAPS, H, L), lambda n: (0, 0, 0, 0)),
            ],
            out_specs=pl.BlockSpec((1, OC_PER_IC, H, L), lambda n: (n, 0, 0, 0)),
        ),
        compiler_params=pltpu.CompilerParams(
            dimension_semantics=("parallel",)),
    )(x_shift, w_bcast)

    # out_slab[n, j, h, w*16 + g] == y[n, g*4 + j, h, w]  ->  back to NCHW.
    # TODO(synk): if the downstream consumer can take the lane-dense slab layout,
    # drop this transpose (it costs as much HBM traffic as the kernel itself).
    out = out_slab.reshape(N, OC_PER_IC, H, W, GROUPS)
    out = jnp.transpose(out, (0, 4, 1, 2, 3)).reshape(N, C_OUT, H, W)
    return out


def reference_forward(x, weight):
    # Pure-JAX reference: grouped conv (feature_group_count=16) + ReLU.
    y = lax.conv_general_dilated(
        x, weight,
        window_strides=(1, 1),
        padding=((1, 1), (1, 1)),
        dimension_numbers=("NCHW", "OIHW", "NCHW"),
        feature_group_count=GROUPS,
    )
    return jnp.maximum(y, 0.0)


if __name__ == "__main__":
    key = jax.random.PRNGKey(0)
    kx, kw_key = jax.random.split(key)

    N, H, W = 2, 16, 16
    x = jax.random.normal(kx, (N, C_IN, H, W), dtype=jnp.float32)
    # (out_ch, in_ch/groups, kH, kW) = (64, 1, 3, 3)
    weight = jax.random.normal(kw_key, (C_OUT, 1, KH, KW), dtype=jnp.float32) * 0.1

    out = jax.block_until_ready(demo_forward(x, weight))
    ref = jax.block_until_ready(reference_forward(x, weight))

    assert out.shape == (N, C_OUT, H, W)
    assert jnp.allclose(out, ref, atol=1e-5, rtol=1e-5), "mismatch vs reference"

    print("KERNEL_OK")
</pallas_src>

<mosaic_0001>
module attributes {stable_mosaic.version = 11 : i64} {
  func.func @_grouped_conv_relu_kernel(%arg0: i32, %arg1: memref<1x9x16x256xf32, #tpu.memory_space<vmem>>, %arg2: memref<4x9x16x256xf32, #tpu.memory_space<vmem>>, %arg3: memref<1x4x16x256xf32, #tpu.memory_space<vmem>>) attributes {dimension_semantics = [#tpu.dimension_semantics<parallel>], iteration_bounds = array<i64: 2>, scalar_prefetch = 0 : i64, scratch_operands = 0 : i64, tpu.core_type = #tpu.core_type<tc>, window_params = [{transform_indices = @transform_0, window_bounds = array<i64: 1, 9, 16, 256>}, {pipeline_mode = #tpu.pipeline_mode<synchronous>, transform_indices = @transform_1, window_bounds = array<i64: 4, 9, 16, 256>}, {transform_indices = @transform_2, window_bounds = array<i64: 1, 4, 16, 256>}]} {
    %c0 = arith.constant 0 : index
    %c0_0 = arith.constant 0 : index
    %c0_1 = arith.constant 0 : index
    %c0_2 = arith.constant 0 : index
    %0 = vector.load %arg1[%c0, %c0_0, %c0_1, %c0_2] : memref<1x9x16x256xf32, #tpu.memory_space<vmem>>, vector<1x1x16x256xf32>
    %1 = vector.shape_cast %0 : vector<1x1x16x256xf32> to vector<16x256xf32>
    %c0_3 = arith.constant 0 : index
    %c1 = arith.constant 1 : index
    %c0_4 = arith.constant 0 : index
    %c0_5 = arith.constant 0 : index
    %2 = vector.load %arg1[%c0_3, %c1, %c0_4, %c0_5] : memref<1x9x16x256xf32, #tpu.memory_space<vmem>>, vector<1x1x16x256xf32>
    %3 = vector.shape_cast %2 : vector<1x1x16x256xf32> to vector<16x256xf32>
    %c0_6 = arith.constant 0 : index
    %c2 = arith.constant 2 : index
    %c0_7 = arith.constant 0 : index
    %c0_8 = arith.constant 0 : index
    %4 = vector.load %arg1[%c0_6, %c2, %c0_7, %c0_8] : memref<1x9x16x256xf32, #tpu.memory_space<vmem>>, vector<1x1x16x256xf32>
    %5 = vector.shape_cast %4 : vector<1x1x16x256xf32> to vector<16x256xf32>
    %c0_9 = arith.constant 0 : index
    %c3 = arith.constant 3 : index
    %c0_10 = arith.constant 0 : index
    %c0_11 = arith.constant 0 : index
    %6 = vector.load %arg1[%c0_9, %c3, %c0_10, %c0_11] : memref<1x9x16x256xf32, #tpu.memory_space<vmem>>, vector<1x1x16x256xf32>
    %7 = vector.shape_cast %6 : vector<1x1x16x256xf32> to vector<16x256xf32>
    %c0_12 = arith.constant 0 : index
    %c4 = arith.constant 4 : index
    %c0_13 = arith.constant 0 : index
    %c0_14 = arith.constant 0 : index
    %8 = vector.load %arg1[%c0_12, %c4, %c0_13, %c0_14] : memref<1x9x16x256xf32, #tpu.memory_space<vmem>>, vector<1x1x16x256xf32>
    %9 = vector.shape_cast %8 : vector<1x1x16x256xf32> to vector<16x256xf32>
    %c0_15 = arith.constant 0 : index
    %c5 = arith.constant 5 : index
    %c0_16 = arith.constant 0 : index
    %c0_17 = arith.constant 0 : index
    %10 = vector.load %arg1[%c0_15, %c5, %c0_16, %c0_17] : memref<1x9x16x256xf32, #tpu.memory_space<vmem>>, vector<1x1x16x256xf32>
    %11 = vector.shape_cast %10 : vector<1x1x16x256xf32> to vector<16x256xf32>
    %c0_18 = arith.constant 0 : index
    %c6 = arith.constant 6 : index
    %c0_19 = arith.constant 0 : index
    %c0_20 = arith.constant 0 : index
    %12 = vector.load %arg1[%c0_18, %c6, %c0_19, %c0_20] : memref<1x9x16x256xf32, #tpu.memory_space<vmem>>, vector<1x1x16x256xf32>
    %13 = vector.shape_cast %12 : vector<1x1x16x256xf32> to vector<16x256xf32>
    %c0_21 = arith.constant 0 : index
    %c7 = arith.constant 7 : index
    %c0_22 = arith.constant 0 : index
    %c0_23 = arith.constant 0 : index
    %14 = vector.load %arg1[%c0_21, %c7, %c0_22, %c0_23] : memref<1x9x16x256xf32, #tpu.memory_space<vmem>>, vector<1x1x16x256xf32>
    %15 = vector.shape_cast %14 : vector<1x1x16x256xf32> to vector<16x256xf32>
    %c0_24 = arith.constant 0 : index
    %c8 = arith.constant 8 : index
    %c0_25 = arith.constant 0 : index
    %c0_26 = arith.constant 0 : index
    %16 = vector.load %arg1[%c0_24, %c8, %c0_25, %c0_26] : memref<1x9x16x256xf32, #tpu.memory_space<vmem>>, vector<1x1x16x256xf32>
    %17 = vector.shape_cast %16 : vector<1x1x16x256xf32> to vector<16x256xf32>
    %c0_27 = arith.constant 0 : index
    %c0_28 = arith.constant 0 : index
    %c0_29 = arith.constant 0 : index
    %c0_30 = arith.constant 0 : index
    %18 = vector.load %arg2[%c0_27, %c0_28, %c0_29, %c0_30] : memref<4x9x16x256xf32, #tpu.memory_space<vmem>>, vector<1x1x16x256xf32>
    %19 = vector.shape_cast %18 : vector<1x1x16x256xf32> to vector<16x256xf32>
    %20 = arith.mulf %1, %19 : vector<16x256xf32>
    %c0_31 = arith.constant 0 : index
    %c1_32 = arith.constant 1 : index
    %c0_33 = arith.constant 0 : index
    %c0_34 = arith.constant 0 : index
    %21 = vector.load %arg2[%c0_31, %c1_32, %c0_33, %c0_34] : memref<4x9x16x256xf32, #tpu.memory_space<vmem>>, vector<1x1x16x256xf32>
    %22 = vector.shape_cast %21 : vector<1x1x16x256xf32> to vector<16x256xf32>
    %23 = arith.mulf %3, %22 : vector<16x256xf32>
    %c0_35 = arith.constant 0 : index
    %c2_36 = arith.constant 2 : index
    %c0_37 = arith.constant 0 : index
    %c0_38 = arith.constant 0 : index
    %24 = vector.load %arg2[%c0_35, %c2_36, %c0_37, %c0_38] : memref<4x9x16x256xf32, #tpu.memory_space<vmem>>, vector<1x1x16x256xf32>
    %25 = vector.shape_cast %24 : vector<1x1x16x256xf32> to vector<16x256xf32>
    %26 = arith.mulf %5, %25 : vector<16x256xf32>
    %27 = arith.addf %20, %26 : vector<16x256xf32>
    %c0_39 = arith.constant 0 : index
    %c3_40 = arith.constant 3 : index
    %c0_41 = arith.constant 0 : index
    %c0_42 = arith.constant 0 : index
    %28 = vector.load %arg2[%c0_39, %c3_40, %c0_41, %c0_42] : memref<4x9x16x256xf32, #tpu.memory_space<vmem>>, vector<1x1x16x256xf32>
    %29 = vector.shape_cast %28 : vector<1x1x16x256xf32> to vector<16x256xf32>
    %30 = arith.mulf %7, %29 : vector<16x256xf32>
    %31 = arith.addf %23, %30 : vector<16x256xf32>
    %c0_43 = arith.constant 0 : index
    %c4_44 = arith.constant 4 : index
    %c0_45 = arith.constant 0 : index
    %c0_46 = arith.constant 0 : index
    %32 = vector.load %arg2[%c0_43, %c4_44, %c0_45, %c0_46] : memref<4x9x16x256xf32, #tpu.memory_space<vmem>>, vector<1x1x16x256xf32>
    %33 = vector.shape_cast %32 : vector<1x1x16x256xf32> to vector<16x256xf32>
    %34 = arith.mulf %9, %33 : vector<16x256xf32>
    %35 = arith.addf %27, %34 : vector<16x256xf32>
    %c0_47 = arith.constant 0 : index
    %c5_48 = arith.constant 5 : index
    %c0_49 = arith.constant 0 : index
    %c0_50 = arith.constant 0 : index
    %36 = vector.load %arg2[%c0_47, %c5_48, %c0_49, %c0_50] : memref<4x9x16x256xf32, #tpu.memory_space<vmem>>, vector<1x1x16x256xf32>
    %37 = vector.shape_cast %36 : vector<1x1x16x256xf32> to vector<16x256xf32>
    %38 = arith.mulf %11, %37 : vector<16x256xf32>
    %39 = arith.addf %31, %38 : vector<16x256xf32>
    %c0_51 = arith.constant 0 : index
    %c6_52 = arith.constant 6 : index
    %c0_53 = arith.constant 0 : index
    %c0_54 = arith.constant 0 : index
    %40 = vector.load %arg2[%c0_51, %c6_52, %c0_53, %c0_54] : memref<4x9x16x256xf32, #tpu.memory_space<vmem>>, vector<1x1x16x256xf32>
    %41 = vector.shape_cast %40 : vector<1x1x16x256xf32> to vector<16x256xf32>
    %42 = arith.mulf %13, %41 : vector<16x256xf32>
    %43 = arith.addf %35, %42 : vector<16x256xf32>
    %c0_55 = arith.constant 0 : index
    %c7_56 = arith.constant 7 : index
    %c0_57 = arith.constant 0 : index
    %c0_58 = arith.constant 0 : index
    %44 = vector.load %arg2[%c0_55, %c7_56, %c0_57, %c0_58] : memref<4x9x16x256xf32, #tpu.memory_space<vmem>>, vector<1x1x16x256xf32>
    %45 = vector.shape_cast %44 : vector<1x1x16x256xf32> to vector<16x256xf32>
    %46 = arith.mulf %15, %45 : vector<16x256xf32>
    %47 = arith.addf %39, %46 : vector<16x256xf32>
    %c0_59 = arith.constant 0 : index
    %c8_60 = arith.constant 8 : index
    %c0_61 = arith.constant 0 : index
    %c0_62 = arith.constant 0 : index
    %48 = vector.load %arg2[%c0_59, %c8_60, %c0_61, %c0_62] : memref<4x9x16x256xf32, #tpu.memory_space<vmem>>, vector<1x1x16x256xf32>
    %49 = vector.shape_cast %48 : vector<1x1x16x256xf32> to vector<16x256xf32>
    %50 = arith.mulf %17, %49 : vector<16x256xf32>
    %51 = arith.addf %43, %50 : vector<16x256xf32>
    %52 = arith.addf %51, %47 : vector<16x256xf32>
    %cst = arith.constant 0.000000e+00 : f32
    %53 = vector.broadcast %cst : f32 to vector<16x256xf32>
    %54 = arith.maximumf %52, %53 : vector<16x256xf32>
    %c0_63 = arith.constant 0 : index
    %c0_64 = arith.constant 0 : index
    %c0_65 = arith.constant 0 : index
    %c0_66 = arith.constant 0 : index
    %55 = vector.load %arg3[%c0_63, %c0_64, %c0_65, %c0_66] : memref<1x4x16x256xf32, #tpu.memory_space<vmem>>, vector<1x1x16x256xf32>
    %56 = vector.shape_cast %55 : vector<1x1x16x256xf32> to vector<16x256xf32>
    %57 = vector.shape_cast %54 : vector<16x256xf32> to vector<1x1x16x256xf32>
    tpu.vector_store %arg3[%c0_63, %c0_64, %c0_65, %c0_66], %57 {strides = array<i32>} : memref<1x4x16x256xf32, #tpu.memory_space<vmem>>, vector<1x1x16x256xf32>,
    %c1_67 = arith.constant 1 : index
    %c0_68 = arith.constant 0 : index
    %c0_69 = arith.constant 0 : index
    %c0_70 = arith.constant 0 : index
    %58 = vector.load %arg2[%c1_67, %c0_68, %c0_69, %c0_70] : memref<4x9x16x256xf32, #tpu.memory_space<vmem>>, vector<1x1x16x256xf32>
    %59 = vector.shape_cast %58 : vector<1x1x16x256xf32> to vector<16x256xf32>
    %60 = arith.mulf %1, %59 : vector<16x256xf32>
    %c1_71 = arith.constant 1 : index
    %c1_72 = arith.constant 1 : index
    %c0_73 = arith.constant 0 : index
    %c0_74 = arith.constant 0 : index
    %61 = vector.load %arg2[%c1_71, %c1_72, %c0_73, %c0_74] : memref<4x9x16x256xf32, #tpu.memory_space<vmem>>, vector<1x1x16x256xf32>
    %62 = vector.shape_cast %61 : vector<1x1x16x256xf32> to vector<16x256xf32>
    %63 = arith.mulf %3, %62 : vector<16x256xf32>
    %c1_75 = arith.constant 1 : index
    %c2_76 = arith.constant 2 : index
    %c0_77 = arith.constant 0 : index
    %c0_78 = arith.constant 0 : index
    %64 = vector.load %arg2[%c1_75, %c2_76, %c0_77, %c0_78] : memref<4x9x16x256xf32, #tpu.memory_space<vmem>>, vector<1x1x16x256xf32>
    %65 = vector.shape_cast %64 : vector<1x1x16x256xf32> to vector<16x256xf32>
    %66 = arith.mulf %5, %65 : vector<16x256xf32>
    %67 = arith.addf %60, %66 : vector<16x256xf32>
    %c1_79 = arith.constant 1 : index
    %c3_80 = arith.constant 3 : index
    %c0_81 = arith.constant 0 : index
    %c0_82 = arith.constant 0 : index
    %68 = vector.load %arg2[%c1_79, %c3_80, %c0_81, %c0_82] : memref<4x9x16x256xf32, #tpu.memory_space<vmem>>, vector<1x1x16x256xf32>
    %69 = vector.shape_cast %68 : vector<1x1x16x256xf32> to vector<16x256xf32>
    %70 = arith.mulf %7, %69 : vector<16x256xf32>
    %71 = arith.addf %63, %70 : vector<16x256xf32>
    %c1_83 = arith.constant 1 : index
    %c4_84 = arith.constant 4 : index
    %c0_85 = arith.constant 0 : index
    %c0_86 = arith.constant 0 : index
    %72 = vector.load %arg2[%c1_83, %c4_84, %c0_85, %c0_86] : memref<4x9x16x256xf32, #tpu.memory_space<vmem>>, vector<1x1x16x256xf32>
    %73 = vector.shape_cast %72 : vector<1x1x16x256xf32> to vector<16x256xf32>
    %74 = arith.mulf %9, %73 : vector<16x256xf32>
    %75 = arith.addf %67, %74 : vector<16x256xf32>
    %c1_87 = arith.constant 1 : index
    %c5_88 = arith.constant 5 : index
    %c0_89 = arith.constant 0 : index
    %c0_90 = arith.constant 0 : index
    %76 = vector.load %arg2[%c1_87, %c5_88, %c0_89, %c0_90] : memref<4x9x16x256xf32, #tpu.memory_space<vmem>>, vector<1x1x16x256xf32>
    %77 = vector.shape_cast %76 : vector<1x1x16x256xf32> to vector<16x256xf32>
    %78 = arith.mulf %11, %77 : vector<16x256xf32>
    %79 = arith.addf %71, %78 : vector<16x256xf32>
    %c1_91 = arith.constant 1 : index
    %c6_92 = arith.constant 6 : index
    %c0_93 = arith.constant 0 : index
    %c0_94 = arith.constant 0 : index
    %80 = vector.load %arg2[%c1_91, %c6_92, %c0_93, %c0_94] : memref<4x9x16x256xf32, #tpu.memory_space<vmem>>, vector<1x1x16x256xf32>
    %81 = vector.shape_cast %80 : vector<1x1x16x256xf32> to vector<16x256xf32>
    %82 = arith.mulf %13, %81 : vector<16x256xf32>
    %83 = arith.addf %75, %82 : vector<16x256xf32>
    %c1_95 = arith.constant 1 : index
    %c7_96 = arith.constant 7 : index
    %c0_97 = arith.constant 0 : index
    %c0_98 = arith.constant 0 : index
    %84 = vector.load %arg2[%c1_95, %c7_96, %c0_97, %c0_98] : memref<4x9x16x256xf32, #tpu.memory_space<vmem>>, vector<1x1x16x256xf32>
    %85 = vector.shape_cast %84 : vector<1x1x16x256xf32> to vector<16x256xf32>
    %86 = arith.mulf %15, %85 : vector<16x256xf32>
    %87 = arith.addf %79, %86 : vector<16x256xf32>
    %c1_99 = arith.constant 1 : index
    %c8_100 = arith.constant 8 : index
    %c0_101 = arith.constant 0 : index
    %c0_102 = arith.constant 0 : index
    %88 = vector.load %arg2[%c1_99, %c8_100, %c0_101, %c0_102] : memref<4x9x16x256xf32, #tpu.memory_space<vmem>>, vector<1x1x16x256xf32>
    %89 = vector.shape_cast %88 : vector<1x1x16x256xf32> to vector<16x256xf32>
    %90 = arith.mulf %17, %89 : vector<16x256xf32>
    %91 = arith.addf %83, %90 : vector<16x256xf32>
    %92 = arith.addf %91, %87 : vector<16x256xf32>
    %cst_103 = arith.constant 0.000000e+00 : f32
    %93 = vector.broadcast %cst_103 : f32 to vector<16x256xf32>
    %94 = arith.maximumf %92, %93 : vector<16x256xf32>
    %c0_104 = arith.constant 0 : index
    %c1_105 = arith.constant 1 : index
    %c0_106 = arith.constant 0 : index
    %c0_107 = arith.constant 0 : index
    %95 = vector.load %arg3[%c0_104, %c1_105, %c0_106, %c0_107] : memref<1x4x16x256xf32, #tpu.memory_space<vmem>>, vector<1x1x16x256xf32>
    %96 = vector.shape_cast %95 : vector<1x1x16x256xf32> to vector<16x256xf32>
    %97 = vector.shape_cast %94 : vector<16x256xf32> to vector<1x1x16x256xf32>
    tpu.vector_store %arg3[%c0_104, %c1_105, %c0_106, %c0_107], %97 {strides = array<i32>} : memref<1x4x16x256xf32, #tpu.memory_space<vmem>>, vector<1x1x16x256xf32>,
    %c2_108 = arith.constant 2 : index
    %c0_109 = arith.constant 0 : index
    %c0_110 = arith.constant 0 : index
    %c0_111 = arith.constant 0 : index
    %98 = vector.load %arg2[%c2_108, %c0_109, %c0_110, %c0_111] : memref<4x9x16x256xf32, #tpu.memory_space<vmem>>, vector<1x1x16x256xf32>
    %99 = vector.shape_cast %98 : vector<1x1x16x256xf32> to vector<16x256xf32>
    %100 = arith.mulf %1, %99 : vector<16x256xf32>
    %c2_112 = arith.constant 2 : index
    %c1_113 = arith.constant 1 : index
    %c0_114 = arith.constant 0 : index
    %c0_115 = arith.constant 0 : index
    %101 = vector.load %arg2[%c2_112, %c1_113, %c0_114, %c0_115] : memref<4x9x16x256xf32, #tpu.memory_space<vmem>>, vector<1x1x16x256xf32>
    %102 = vector.shape_cast %101 : vector<1x1x16x256xf32> to vector<16x256xf32>
    %103 = arith.mulf %3, %102 : vector<16x256xf32>
    %c2_116 = arith.constant 2 : index
    %c2_117 = arith.constant 2 : index
    %c0_118 = arith.constant 0 : index
    %c0_119 = arith.constant 0 : index
    %104 = vector.load %arg2[%c2_116, %c2_117, %c0_118, %c0_119] : memref<4x9x16x256xf32, #tpu.memory_space<vmem>>, vector<1x1x16x256xf32>
    %105 = vector.shape_cast %104 : vector<1x1x16x256xf32> to vector<16x256xf32>
    %106 = arith.mulf %5, %105 : vector<16x256xf32>
    %107 = arith.addf %100, %106 : vector<16x256xf32>
    %c2_120 = arith.constant 2 : index
    %c3_121 = arith.constant 3 : index
    %c0_122 = arith.constant 0 : index
    %c0_123 = arith.constant 0 : index
    %108 = vector.load %arg2[%c2_120, %c3_121, %c0_122, %c0_123] : memref<4x9x16x256xf32, #tpu.memory_space<vmem>>, vector<1x1x16x256xf32>
    %109 = vector.shape_cast %108 : vector<1x1x16x256xf32> to vector<16x256xf32>
    %110 = arith.mulf %7, %109 : vector<16x256xf32>
    %111 = arith.addf %103, %110 : vector<16x256xf32>
    %c2_124 = arith.constant 2 : index
    %c4_125 = arith.constant 4 : index
    %c0_126 = arith.constant 0 : index
    %c0_127 = arith.constant 0 : index
    %112 = vector.load %arg2[%c2_124, %c4_125, %c0_126, %c0_127] : memref<4x9x16x256xf32, #tpu.memory_space<vmem>>, vector<1x1x16x256xf32>
    %113 = vector.shape_cast %112 : vector<1x1x16x256xf32> to vector<16x256xf32>
    %114 = arith.mulf %9, %113 : vector<16x256xf32>
    %115 = arith.addf %107, %114 : vector<16x256xf32>
    %c2_128 = arith.constant 2 : index
    %c5_129 = arith.constant 5 : index
    %c0_130 = arith.constant 0 : index
    %c0_131 = arith.constant 0 : index
    %116 = vector.load %arg2[%c2_128, %c5_129, %c0_130, %c0_131] : memref<4x9x16x256xf32, #tpu.memory_space<vmem>>, vector<1x1x16x256xf32>
    %117 = vector.shape_cast %116 : vector<1x1x16x256xf32> to vector<16x256xf32>
    %118 = arith.mulf %11, %117 : vector<16x256xf32>
    %119 = arith.addf %111, %118 : vector<16x256xf32>
    %c2_132 = arith.constant 2 : index
    %c6_133 = arith.constant 6 : index
    %c0_134 = arith.constant 0 : index
    %c0_135 = arith.constant 0 : index
    %120 = vector.load %arg2[%c2_132, %c6_133, %c0_134, %c0_135] : memref<4x9x16x256xf32, #tpu.memory_space<vmem>>, vector<1x1x16x256xf32>
    %121 = vector.shape_cast %120 : vector<1x1x16x256xf32> to vector<16x256xf32>
    %122 = arith.mulf %13, %121 : vector<16x256xf32>
    %123 = arith.addf %115, %122 : vector<16x256xf32>
    %c2_136 = arith.constant 2 : index
    %c7_137 = arith.constant 7 : index
    %c0_138 = arith.constant 0 : index
    %c0_139 = arith.constant 0 : index
    %124 = vector.load %arg2[%c2_136, %c7_137, %c0_138, %c0_139] : memref<4x9x16x256xf32, #tpu.memory_space<vmem>>, vector<1x1x16x256xf32>
    %125 = vector.shape_cast %124 : vector<1x1x16x256xf32> to vector<16x256xf32>
    %126 = arith.mulf %15, %125 : vector<16x256xf32>
    %127 = arith.addf %119, %126 : vector<16x256xf32>
    %c2_140 = arith.constant 2 : index
    %c8_141 = arith.constant 8 : index
    %c0_142 = arith.constant 0 : index
    %c0_143 = arith.constant 0 : index
    %128 = vector.load %arg2[%c2_140, %c8_141, %c0_142, %c0_143] : memref<4x9x16x256xf32, #tpu.memory_space<vmem>>, vector<1x1x16x256xf32>
    %129 = vector.shape_cast %128 : vector<1x1x16x256xf32> to vector<16x256xf32>
    %130 = arith.mulf %17, %129 : vector<16x256xf32>
    %131 = arith.addf %123, %130 : vector<16x256xf32>
    %132 = arith.addf %131, %127 : vector<16x256xf32>
    %cst_144 = arith.constant 0.000000e+00 : f32
    %133 = vector.broadcast %cst_144 : f32 to vector<16x256xf32>
    %134 = arith.maximumf %132, %133 : vector<16x256xf32>
    %c0_145 = arith.constant 0 : index
    %c2_146 = arith.constant 2 : index
    %c0_147 = arith.constant 0 : index
    %c0_148 = arith.constant 0 : index
    %135 = vector.load %arg3[%c0_145, %c2_146, %c0_147, %c0_148] : memref<1x4x16x256xf32, #tpu.memory_space<vmem>>, vector<1x1x16x256xf32>
    %136 = vector.shape_cast %135 : vector<1x1x16x256xf32> to vector<16x256xf32>
    %137 = vector.shape_cast %134 : vector<16x256xf32> to vector<1x1x16x256xf32>
    tpu.vector_store %arg3[%c0_145, %c2_146, %c0_147, %c0_148], %137 {strides = array<i32>} : memref<1x4x16x256xf32, #tpu.memory_space<vmem>>, vector<1x1x16x256xf32>,
    %c3_149 = arith.constant 3 : index
    %c0_150 = arith.constant 0 : index
    %c0_151 = arith.constant 0 : index
    %c0_152 = arith.constant 0 : index
    %138 = vector.load %arg2[%c3_149, %c0_150, %c0_151, %c0_152] : memref<4x9x16x256xf32, #tpu.memory_space<vmem>>, vector<1x1x16x256xf32>
    %139 = vector.shape_cast %138 : vector<1x1x16x256xf32> to vector<16x256xf32>
    %140 = arith.mulf %1, %139 : vector<16x256xf32>
    %c3_153 = arith.constant 3 : index
    %c1_154 = arith.constant 1 : index
    %c0_155 = arith.constant 0 : index
    %c0_156 = arith.constant 0 : index
    %141 = vector.load %arg2[%c3_153, %c1_154, %c0_155, %c0_156] : memref<4x9x16x256xf32, #tpu.memory_space<vmem>>, vector<1x1x16x256xf32>
    %142 = vector.shape_cast %141 : vector<1x1x16x256xf32> to vector<16x256xf32>
    %143 = arith.mulf %3, %142 : vector<16x256xf32>
    %c3_157 = arith.constant 3 : index
    %c2_158 = arith.constant 2 : index
    %c0_159 = arith.constant 0 : index
    %c0_160 = arith.constant 0 : index
    %144 = vector.load %arg2[%c3_157, %c2_158, %c0_159, %c0_160] : memref<4x9x16x256xf32, #tpu.memory_space<vmem>>, vector<1x1x16x256xf32>
    %145 = vector.shape_cast %144 : vector<1x1x16x256xf32> to vector<16x256xf32>
    %146 = arith.mulf %5, %145 : vector<16x256xf32>
    %147 = arith.addf %140, %146 : vector<16x256xf32>
    %c3_161 = arith.constant 3 : index
    %c3_162 = arith.constant 3 : index
    %c0_163 = arith.constant 0 : index
    %c0_164 = arith.constant 0 : index
    %148 = vector.load %arg2[%c3_161, %c3_162, %c0_163, %c0_164] : memref<4x9x16x256xf32, #tpu.memory_space<vmem>>, vector<1x1x16x256xf32>
    %149 = vector.shape_cast %148 : vector<1x1x16x256xf32> to vector<16x256xf32>
    %150 = arith.mulf %7, %149 : vector<16x256xf32>
    %151 = arith.addf %143, %150 : vector<16x256xf32>
    %c3_165 = arith.constant 3 : index
    %c4_166 = arith.constant 4 : index
    %c0_167 = arith.constant 0 : index
    %c0_168 = arith.constant 0 : index
    %152 = vector.load %arg2[%c3_165, %c4_166, %c0_167, %c0_168] : memref<4x9x16x256xf32, #tpu.memory_space<vmem>>, vector<1x1x16x256xf32>
    %153 = vector.shape_cast %152 : vector<1x1x16x256xf32> to vector<16x256xf32>
    %154 = arith.mulf %9, %153 : vector<16x256xf32>
    %155 = arith.addf %147, %154 : vector<16x256xf32>
    %c3_169 = arith.constant 3 : index
    %c5_170 = arith.constant 5 : index
    %c0_171 = arith.constant 0 : index
    %c0_172 = arith.constant 0 : index
    %156 = vector.load %arg2[%c3_169, %c5_170, %c0_171, %c0_172] : memref<4x9x16x256xf32, #tpu.memory_space<vmem>>, vector<1x1x16x256xf32>
    %157 = vector.shape_cast %156 : vector<1x1x16x256xf32> to vector<16x256xf32>
    %158 = arith.mulf %11, %157 : vector<16x256xf32>
    %159 = arith.addf %151, %158 : vector<16x256xf32>
    %c3_173 = arith.constant 3 : index
    %c6_174 = arith.constant 6 : index
    %c0_175 = arith.constant 0 : index
    %c0_176 = arith.constant 0 : index
    %160 = vector.load %arg2[%c3_173, %c6_174, %c0_175, %c0_176] : memref<4x9x16x256xf32, #tpu.memory_space<vmem>>, vector<1x1x16x256xf32>
    %161 = vector.shape_cast %160 : vector<1x1x16x256xf32> to vector<16x256xf32>
    %162 = arith.mulf %13, %161 : vector<16x256xf32>
    %163 = arith.addf %155, %162 : vector<16x256xf32>
    %c3_177 = arith.constant 3 : index
    %c7_178 = arith.constant 7 : index
    %c0_179 = arith.constant 0 : index
    %c0_180 = arith.constant 0 : index
    %164 = vector.load %arg2[%c3_177, %c7_178, %c0_179, %c0_180] : memref<4x9x16x256xf32, #tpu.memory_space<vmem>>, vector<1x1x16x256xf32>
    %165 = vector.shape_cast %164 : vector<1x1x16x256xf32> to vector<16x256xf32>
    %166 = arith.mulf %15, %165 : vector<16x256xf32>
    %167 = arith.addf %159, %166 : vector<16x256xf32>
    %c3_181 = arith.constant 3 : index
    %c8_182 = arith.constant 8 : index
    %c0_183 = arith.constant 0 : index
    %c0_184 = arith.constant 0 : index
    %168 = vector.load %arg2[%c3_181, %c8_182, %c0_183, %c0_184] : memref<4x9x16x256xf32, #tpu.memory_space<vmem>>, vector<1x1x16x256xf32>
    %169 = vector.shape_cast %168 : vector<1x1x16x256xf32> to vector<16x256xf32>
    %170 = arith.mulf %17, %169 : vector<16x256xf32>
    %171 = arith.addf %163, %170 : vector<16x256xf32>
    %172 = arith.addf %171, %167 : vector<16x256xf32>
    %cst_185 = arith.constant 0.000000e+00 : f32
    %173 = vector.broadcast %cst_185 : f32 to vector<16x256xf32>
    %174 = arith.maximumf %172, %173 : vector<16x256xf32>
    %c0_186 = arith.constant 0 : index
    %c3_187 = arith.constant 3 : index
    %c0_188 = arith.constant 0 : index
    %c0_189 = arith.constant 0 : index
    %175 = vector.load %arg3[%c0_186, %c3_187, %c0_188, %c0_189] : memref<1x4x16x256xf32, #tpu.memory_space<vmem>>, vector<1x1x16x256xf32>
    %176 = vector.shape_cast %175 : vector<1x1x16x256xf32> to vector<16x256xf32>
    %177 = vector.shape_cast %174 : vector<16x256xf32> to vector<1x1x16x256xf32>
    tpu.vector_store %arg3[%c0_186, %c3_187, %c0_188, %c0_189], %177 {strides = array<i32>} : memref<1x4x16x256xf32, #tpu.memory_space<vmem>>, vector<1x1x16x256xf32>,
    return
  }
  func.func @transform_0(%arg0: i32) -> (i32, i32, i32, i32) {
    %c0_i32 = arith.constant 0 : i32
    %c0_i32_0 = arith.constant 0 : i32
    %c0_i32_1 = arith.constant 0 : i32
    %c0_i32_2 = arith.constant 0 : i32
    return %arg0, %c0_i32, %c0_i32_0, %c0_i32_1 : i32, i32, i32, i32
  }
  func.func @transform_1(%arg0: i32) -> (i32, i32, i32, i32) {
    %c0_i32 = arith.constant 0 : i32
    %c0_i32_0 = arith.constant 0 : i32
    %c0_i32_1 = arith.constant 0 : i32
    %c0_i32_2 = arith.constant 0 : i32
    %c0_i32_3 = arith.constant 0 : i32
    return %c0_i32, %c0_i32_0, %c0_i32_1, %c0_i32_2 : i32, i32, i32, i32
  }
  func.func @transform_2(%arg0: i32) -> (i32, i32, i32, i32) {
    %c0_i32 = arith.constant 0 : i32
    %c0_i32_0 = arith.constant 0 : i32
    %c0_i32_1 = arith.constant 0 : i32
    %c0_i32_2 = arith.constant 0 : i32
    return %arg0, %c0_i32, %c0_i32_0, %c0_i32_1 : i32, i32, i32, i32
  }
}

</mosaic_0001>

<llo_original>
// kernel: tpu_custom_call.1
$region0: #{tpu_custom_call.1}
  #allocation0 [shape = 'u32[]', space=smem, size = 0x4, offset = 0x4, fixed_abs, tag = 'smem constant byte address 0x4 - core index']
  #allocation1 [shape = 'u32[144,128]{1,0:T(1,128)}', space=vmem, size = 0x12000, scoped, tag = 'internal scratch']
  %s0 = inlined_call_operand.hbm [shape: f32[2,9,16,256], index: 0, kind: input, shape index: {}]
  %s1 = inlined_call_operand.hbm [shape: f32[4,9,16,256], index: 1, kind: input, shape index: {}]
  %s2 = inlined_call_operand.hbm [shape: f32[2,4,16,256], index: 2, kind: output, shape index: {}]
  %s3 = sld [smem:[#allocation0]]
  $region49: #{tpu_custom_call.1} parent=0
    _
  %s5 = ssub.s32 1, %s3
  %s6 = scalar_select 0, %s5, %s3
  $region1: #{tpu_custom_call.1} parent=0
    #allocation2 [shape = 'u8[294912]{0}', space=vmem, size = 0x48000, scoped, tag = 'input window, operand 0']
    #allocation3 [shape = 's32[2]{0}', space=sflag, size = 0x8, scoped, tag = 'scoped memory for tpu_custom_call.1']
    #allocation4 [shape = 's32[2]{0}', space=sflag, size = 0x8, scoped, tag = 'scoped memory for tpu_custom_call.1']
    #allocation5 [shape = 'u8[589824]{0}', space=vmem, size = 0x90000, scoped, tag = 'input window, operand 1, single buffered']
    #allocation6 [shape = 's32[1]{0}', space=sflag, size = 0x4, scoped, tag = 'scoped memory for tpu_custom_call.1']
    #allocation7 [shape = 'u8[131072]{0}', space=vmem, size = 0x20000, scoped, tag = 'output window, operand 0']
    %7 = vsyncpa [#allocation3], 0
    %s8 = scalar_lea.sflag [#allocation3], 1
    %9 = vsyncpa %s8, 0
    %10 = vsyncpa [#allocation6], 0
    %11 = vsyncpa [#allocation4], 0
    %s12 = scalar_lea.sflag [#allocation4], 1
    %13 = vsyncpa %s12, 0
    loop: start=0, step=1, limit=4
    $region2: #{tpu_custom_call.1} parent=1 // loop_pre_header
      _
    $region3: #{tpu_custom_call.1} parent=1 // loop_header
      %s15 = sphi 0, %s19
      %p16 = scmp.ge.s32.totalorder %s15, 4
      %s25 = sphi 0, %s27
      %s28 = sphi 0, %s25
      %s29 = sphi 0, %s28
      %s45 = sphi 0, %s29
      %s49 = sphi 0, %s49
      %s51 = sphi 0, %s49
      %s52 = sphi 0, %s51
      %s66 = sphi 0, %s52
      %s72 = sphi 0, %s74
      %s75 = sphi 0, %s72
      %s76 = sphi 0, %s75
      %s92 = sphi 0, %s76
    $region4: #{tpu_custom_call.1} parent=1 // loop_header_branch
      %18 = sbr.rel (%p16) target = $region8
    $region5: #{tpu_custom_call.1} parent=1 // loop_body
      %s20 = ssub.s32 %s15, 1
      %s21 = ssub.s32 %s15, 2
      %s22 = sadd.s32 %s15, 1
      %s23 = ssub.s32 %s15, %s22
      %p24 = scmp.eq.s32.totalorder %s23, 0
      %s26 = sadd.s32 %s25, 1
      %s27 = scalar_select %p24, %s25, %s26
      %p30 = pneg %p24
      %p31 = scmp.eq.s32.totalorder %s15, 1
      %p32 = por %p30, %p31
      %p33 = scmp.ne.s32.totalorder %s25, %s28
      %p34 = scmp.eq.s32.totalorder %s15, 0
      %p35 = por %p33, %p34
      %p36 = scmp.ne.s32.totalorder %s25, %s28
      %p37 = scmp.eq.s32.totalorder %s20, 1
      %p38 = por %p36, %p37
      %p39 = scmp.ne.s32.totalorder %s28, %s29
      %p40 = scmp.eq.s32.totalorder %s20, 0
      %p41 = por %p39, %p40
      %p42 = scmp.ne.s32.totalorder %s28, %s29
      %p43 = scmp.eq.s32.totalorder %s21, 1
      %p44 = por %p42, %p43
      %p46 = scmp.ne.s32.totalorder %s29, %s45
      %p47 = scmp.eq.s32.totalorder %s21, 0
      %p48 = por %p46, %p47
      %s50 = sadd.s32 %s49, 1
      %p53 = scmp.eq.s32.totalorder %s15, 1
      %p54 = scmp.ne.s32.totalorder %s49, %s51
      %p55 = scmp.eq.s32.totalorder %s15, 0
      %p56 = por %p54, %p55
      %p57 = scmp.ne.s32.totalorder %s49, %s51
      %p58 = scmp.eq.s32.totalorder %s20, 1
      %p59 = por %p57, %p58
      %p60 = scmp.ne.s32.totalorder %s51, %s52
      %p61 = scmp.eq.s32.totalorder %s20, 0
      %p62 = por %p60, %p61
      %p63 = scmp.ne.s32.totalorder %s51, %s52
      %p64 = scmp.eq.s32.totalorder %s21, 1
      %p65 = por %p63, %p64
      %p67 = scmp.ne.s32.totalorder %s52, %s66
      %p68 = scmp.eq.s32.totalorder %s21, 0
      %p69 = por %p67, %p68
      %s70 = ssub.s32 %s15, %s22
      %p71 = scmp.eq.s32.totalorder %s70, 0
      %s73 = sadd.s32 %s72, 1
      %s74 = scalar_select %p71, %s72, %s73
      %p77 = pneg %p71
      %p78 = scmp.eq.s32.totalorder %s15, 1
      %p79 = por %p77, %p78
      %p80 = scmp.ne.s32.totalorder %s72, %s75
      %p81 = scmp.eq.s32.totalorder %s15, 0
      %p82 = por %p80, %p81
      %p83 = scmp.ne.s32.totalorder %s72, %s75
      %p84 = scmp.eq.s32.totalorder %s20, 1
      %p85 = por %p83, %p84
      %p86 = scmp.ne.s32.totalorder %s75, %s76
      %p87 = scmp.eq.s32.totalorder %s20, 0
      %p88 = por %p86, %p87
      %p89 = scmp.ne.s32.totalorder %s75, %s76
      %p90 = scmp.eq.s32.totalorder %s21, 1
      %p91 = por %p89, %p90
      %p93 = scmp.ne.s32.totalorder %s76, %s92
      %p94 = scmp.eq.s32.totalorder %s21, 0
      %p95 = por %p93, %p94
      %p96 = scmp.le.s32.totalorder 1, %s15
      %p97 = scmp.lt.s32.totalorder %s15, 3
      %p98 = pnand %p96, %p97
      %p99 = pneg %p98
      // Predicated region
      $region9: #{tpu_custom_call.1} parent=5 // pred_check
        _
      $region10: #{tpu_custom_call.1} parent=5 // pred_check_branch
        %101 = sbr.rel (%p98) target = $region12
      $region11: #{tpu_custom_call.1} parent=5 // pred_region
        %s102 = ssub.s32 %s15, 1
        // Predicated region
        $region13: #{tpu_custom_call.1} parent=11 // pred_check
          %p103 = pneg %p62
        $region14: #{tpu_custom_call.1} parent=11 // pred_check_branch
          %105 = sbr.rel (%p103) target = $region16
        $region15: #{tpu_custom_call.1} parent=11 // pred_region
          %s107 = ssub.s32 18432, 18432
          %108 = vsyncadd [#allocation6], %s107
          %s109 = sshll.u32 [#allocation5], 4
          %s110 = int_to_ptr.vmem [resolvable:$true] %s109
          %115 = dma.hbm_to_vmem [thread:$0]  %s1, 18432, %s110, [#allocation6], 256, 256, 16
        $region16: #{tpu_custom_call.1} parent=11 // pred_fallthru
          _
      $region12: #{tpu_custom_call.1} parent=5 // pred_fallthru
        _
      %p116 = scmp.lt.s32.totalorder %s15, 2
      // Predicated region
      $region17: #{tpu_custom_call.1} parent=5 // pred_check
        %p117 = pneg %p116
      $region18: #{tpu_custom_call.1} parent=5 // pred_check_branch
        %119 = sbr.rel (%p117) target = $region20
      $region19: #{tpu_custom_call.1} parent=5 // pred_region
        // Predicated region
        $region21: #{tpu_custom_call.1} parent=19 // pred_check
          %p120 = pneg %p35
        $region22: #{tpu_custom_call.1} parent=19 // pred_check_branch
          %122 = sbr.rel (%p120) target = $region24
        $region23: #{tpu_custom_call.1} parent=19 // pred_region
          %s123 = sand.u32 %s25, 1
          %s124 = scalar_lea.sflag [#allocation3], %s123
          %s125 = sand.u32 %s25, 1
          %s126 = smul.addr %s125, 288
          %s127 = scalar_lea.vmem [#allocation2], %s126
          %s129 = ssub.s32 4608, 4608
          %130 = vsyncadd %s124, %s129
          %s131 = smul.addr %s15, 36
          %s132 = smul.addr %s131, 128
          %s133 = scalar_lea.hbm %s0, %s132
          %s134 = sshll.u32 %s127, 4
          %s135 = int_to_ptr.vmem [resolvable:$true] %s134
          %140 = dma.hbm_to_vmem [thread:$0]  %s133, 4608, %s135, %s124, 256, 256, 16
        $region24: #{tpu_custom_call.1} parent=19 // pred_fallthru
          _
      $region20: #{tpu_custom_call.1} parent=5 // pred_fallthru
        _
      %p141 = scmp.le.s32.totalorder 1, %s15
      %p142 = scmp.lt.s32.totalorder %s15, 3
      %p143 = pnand %p141, %p142
      %p144 = pneg %p143
      // Predicated region
      $region25: #{tpu_custom_call.1} parent=5 // pred_check
        _
      $region26: #{tpu_custom_call.1} parent=5 // pred_check_branch
        %146 = sbr.rel (%p143) target = $region28
      $region27: #{tpu_custom_call.1} parent=5 // pred_region
        %s147 = ssub.s32 %s15, 1
        %s148 = sand.u32 %s28, 1
        %s149 = scalar_lea.sflag [#allocation3], %s148
        %s150 = sand.u32 %s28, 1
        %s151 = smul.addr %s150, 288
        %s152 = scalar_lea.vmem [#allocation2], %s151
        // Predicated region
        $region29: #{tpu_custom_call.1} parent=27 // pred_check
          %p153 = pneg %p41
        $region30: #{tpu_custom_call.1} parent=27 // pred_check_branch
          %155 = sbr.rel (%p153) target = $region32
        $region31: #{tpu_custom_call.1} parent=27 // pred_region
          %156 = dma.done %s149, 4608
        $region32: #{tpu_custom_call.1} parent=27 // pred_fallthru
          _
        // Predicated region
        $region33: #{tpu_custom_call.1} parent=27 // pred_check
          %p157 = pneg %p62
        $region34: #{tpu_custom_call.1} parent=27 // pred_check_branch
          %159 = sbr.rel (%p157) target = $region36
        $region35: #{tpu_custom_call.1} parent=27 // pred_region
          %160 = dma.done [#allocation6], 18432
        $region36: #{tpu_custom_call.1} parent=27 // pred_fallthru
          _
        %s161 = sand.u32 %s28, 1
        %s162 = scalar_lea.sflag [#allocation3], %s161
        %s163 = sand.u32 %s28, 1
        %s164 = smul.addr %s163, 288
        %s165 = scalar_lea.vmem [#allocation2], %s164
        %p166 = pneg %p41
        %p167 = pneg %p38
        %p168 = pneg %p62
        %p169 = pneg %p59
        %p170 = pneg %p88
        %p171 = pneg %p85
        %s172 = sand.u32 %s75, 1
        %s173 = scalar_lea.sflag [#allocation4], %s172
        %s174 = sand.u32 %s75, 1
        %s175 = smul.addr %s174, 128
        %s176 = scalar_lea.vmem [#allocation7], %s175
        %v177 = vld [vmem:[%s152] sm:$0xff]
        %v178 = vld [vmem:[%s152 + $0x8] sm:$0xff]
        %v179 = vld [vmem:[%s152 + $0x10] sm:$0xff]
        %v180 = vld [vmem:[%s152 + $0x18] sm:$0xff]
        %s181 = scalar_lea.vmem %s152, 32 [#allocation2]
        %v182 = vld [vmem:[%s181] sm:$0xff]
        %v183 = vld [vmem:[%s181 + $0x8] sm:$0xff]
        %v184 = vld [vmem:[%s181 + $0x10] sm:$0xff]
        %v185 = vld [vmem:[%s181 + $0x18] sm:$0xff]
        %s186 = scalar_lea.vmem %s152, 64 [#allocation2]
        %v187 = vld [vmem:[%s186] sm:$0xff]
        %v188 = vld [vmem:[%s186 + $0x8] sm:$0xff]
        %v189 = vld [vmem:[%s186 + $0x10] sm:$0xff]
        %v190 = vld [vmem:[%s186 + $0x18] sm:$0xff]
        %s191 = scalar_lea.vmem %s152, 96 [#allocation2]
        %v192 = vld [vmem:[%s191] sm:$0xff]
        %v193 = vld [vmem:[%s191 + $0x8] sm:$0xff]
        %v194 = vld [vmem:[%s191 + $0x10] sm:$0xff]
        %v195 = vld [vmem:[%s191 + $0x18] sm:$0xff]
        %s196 = scalar_lea.vmem %s152, 128 [#allocation2]
        %v197 = vld [vmem:[%s196] sm:$0xff]
        %v198 = vld [vmem:[%s196 + $0x8] sm:$0xff]
        %v199 = vld [vmem:[%s196 + $0x10] sm:$0xff]
        %v200 = vld [vmem:[%s196 + $0x18] sm:$0xff]
        %s201 = scalar_lea.vmem %s152, 160 [#allocation2]
        %v202 = vld [vmem:[%s201] sm:$0xff]
        %v203 = vld [vmem:[%s201 + $0x8] sm:$0xff]
        %v204 = vld [vmem:[%s201 + $0x10] sm:$0xff]
        %v205 = vld [vmem:[%s201 + $0x18] sm:$0xff]
        %s206 = scalar_lea.vmem %s152, 192 [#allocation2]
        %v207 = vld [vmem:[%s206] sm:$0xff]
        %v208 = vld [vmem:[%s206 + $0x8] sm:$0xff]
        %v209 = vld [vmem:[%s206 + $0x10] sm:$0xff]
        %v210 = vld [vmem:[%s206 + $0x18] sm:$0xff]
        %s211 = scalar_lea.vmem %s152, 224 [#allocation2]
        %v212 = vld [vmem:[%s211] sm:$0xff]
        %v213 = vld [vmem:[%s211 + $0x8] sm:$0xff]
        %v214 = vld [vmem:[%s211 + $0x10] sm:$0xff]
        %v215 = vld [vmem:[%s211 + $0x18] sm:$0xff]
        %s216 = scalar_lea.vmem %s152, 256 [#allocation2]
        %v217 = vld [vmem:[%s216] sm:$0xff]
        %v218 = vld [vmem:[%s216 + $0x8] sm:$0xff]
        %v219 = vld [vmem:[%s216 + $0x10] sm:$0xff]
        %v220 = vld [vmem:[%s216 + $0x18] sm:$0xff]
        %v221 = vld [vmem:[#allocation5] sm:$0xff]
        %v222 = vld [vmem:[#allocation5 + $0x8] sm:$0xff]
        %v223 = vld [vmem:[#allocation5 + $0x10] sm:$0xff]
        %v224 = vld [vmem:[#allocation5 + $0x18] sm:$0xff]
        %v225 = vmul.f32 %v177, %v221
        %v226 = vmul.f32 %v178, %v222
        %v227 = vmul.f32 %v179, %v223
        %v228 = vmul.f32 %v180, %v224
        %s229 = scalar_lea.vmem [#allocation5], 32
        %v230 = vld [vmem:[%s229] sm:$0xff]
        %v231 = vld [vmem:[%s229 + $0x8] sm:$0xff]
        %v232 = vld [vmem:[%s229 + $0x10] sm:$0xff]
        %v233 = vld [vmem:[%s229 + $0x18] sm:$0xff]
        %v234 = vmul.f32 %v182, %v230
        %v235 = vmul.f32 %v183, %v231
        %v236 = vmul.f32 %v184, %v232
        %v237 = vmul.f32 %v185, %v233
        %s238 = scalar_lea.vmem [#allocation5], 64
        %v239 = vld [vmem:[%s238] sm:$0xff]
        %v240 = vld [vmem:[%s238 + $0x8] sm:$0xff]
        %v241 = vld [vmem:[%s238 + $0x10] sm:$0xff]
        %v242 = vld [vmem:[%s238 + $0x18] sm:$0xff]
        %v243 = vmul.f32 %v187, %v239
        %v244 = vmul.f32 %v188, %v240
        %v245 = vmul.f32 %v189, %v241
        %v246 = vmul.f32 %v190, %v242
        %v247 = vadd.f32 %v225, %v243
        %v248 = vadd.f32 %v226, %v244
        %v249 = vadd.f32 %v227, %v245
        %v250 = vadd.f32 %v228, %v246
        %s251 = scalar_lea.vmem [#allocation5], 96
        %v252 = vld [vmem:[%s251] sm:$0xff]
        %v253 = vld [vmem:[%s251 + $0x8] sm:$0xff]
        %v254 = vld [vmem:[%s251 + $0x10] sm:$0xff]
        %v255 = vld [vmem:[%s251 + $0x18] sm:$0xff]
        %v256 = vmul.f32 %v192, %v252
        %v257 = vmul.f32 %v193, %v253
        %v258 = vmul.f32 %v194, %v254
        %v259 = vmul.f32 %v195, %v255
        %v260 = vadd.f32 %v234, %v256
        %v261 = vadd.f32 %v235, %v257
        %v262 = vadd.f32 %v236, %v258
        %v263 = vadd.f32 %v237, %v259
        %s264 = scalar_lea.vmem [#allocation5], 128
        %v265 = vld [vmem:[%s264] sm:$0xff]
        %v266 = vld [vmem:[%s264 + $0x8] sm:$0xff]
        %v267 = vld [vmem:[%s264 + $0x10] sm:$0xff]
        %v268 = vld [vmem:[%s264 + $0x18] sm:$0xff]
        %v269 = vmul.f32 %v197, %v265
        %v270 = vmul.f32 %v198, %v266
        %v271 = vmul.f32 %v199, %v267
        %v272 = vmul.f32 %v200, %v268
        %v273 = vadd.f32 %v247, %v269
        %v274 = vadd.f32 %v248, %v270
        %v275 = vadd.f32 %v249, %v271
        %v276 = vadd.f32 %v250, %v272
        %s277 = scalar_lea.vmem [#allocation5], 160
        %v278 = vld [vmem:[%s277] sm:$0xff]
        %v279 = vld [vmem:[%s277 + $0x8] sm:$0xff]
        %v280 = vld [vmem:[%s277 + $0x10] sm:$0xff]
        %v281 = vld [vmem:[%s277 + $0x18] sm:$0xff]
        %v282 = vmul.f32 %v202, %v278
        %v283 = vmul.f32 %v203, %v279
        %v284 = vmul.f32 %v204, %v280
        %v285 = vmul.f32 %v205, %v281
        %v286 = vadd.f32 %v260, %v282
        %v287 = vadd.f32 %v261, %v283
        %v288 = vadd.f32 %v262, %v284
        %v289 = vadd.f32 %v263, %v285
        %s290 = scalar_lea.vmem [#allocation5], 192
        %v291 = vld [vmem:[%s290] sm:$0xff]
        %v292 = vld [vmem:[%s290 + $0x8] sm:$0xff]
        %v293 = vld [vmem:[%s290 + $0x10] sm:$0xff]
        %v294 = vld [vmem:[%s290 + $0x18] sm:$0xff]
        %v295 = vmul.f32 %v207, %v291
        %v296 = vmul.f32 %v208, %v292
        %v297 = vmul.f32 %v209, %v293
        %v298 = vmul.f32 %v210, %v294
        %v299 = vadd.f32 %v273, %v295
        %v300 = vadd.f32 %v274, %v296
        %v301 = vadd.f32 %v275, %v297
        %v302 = vadd.f32 %v276, %v298
        %s303 = scalar_lea.vmem [#allocation5], 224
        %v304 = vld [vmem:[%s303] sm:$0xff]
        %v305 = vld [vmem:[%s303 + $0x8] sm:$0xff]
        %v306 = vld [vmem:[%s303 + $0x10] sm:$0xff]
        %v307 = vld [vmem:[%s303 + $0x18] sm:$0xff]
        %v308 = vmul.f32 %v212, %v304
        %v309 = vmul.f32 %v213, %v305
        %v310 = vmul.f32 %v214, %v306
        %v311 = vmul.f32 %v215, %v307
        %v312 = vadd.f32 %v286, %v308
        %v313 = vadd.f32 %v287, %v309
        %v314 = vadd.f32 %v288, %v310
        %v315 = vadd.f32 %v289, %v311
        %s316 = scalar_lea.vmem [#allocation5], 256
        %v317 = vld [vmem:[%s316] sm:$0xff]
        %v318 = vld [vmem:[%s316 + $0x8] sm:$0xff]
        %v319 = vld [vmem:[%s316 + $0x10] sm:$0xff]
        %v320 = vld [vmem:[%s316 + $0x18] sm:$0xff]
        %v321 = vmul.f32 %v217, %v317
        %v322 = vmul.f32 %v218, %v318
        %v323 = vmul.f32 %v219, %v319
        %v324 = vmul.f32 %v220, %v320
        %v325 = vadd.f32 %v299, %v321
        %v326 = vadd.f32 %v300, %v322
        %v327 = vadd.f32 %v301, %v323
        %v328 = vadd.f32 %v302, %v324
        %v329 = vadd.f32 %v325, %v312
        %v330 = vadd.f32 %v326, %v313
        %v331 = vadd.f32 %v327, %v314
        %v332 = vadd.f32 %v328, %v315
        %v333 = vmax.f32 %v329, 0.0
        %v334 = vmax.f32 %v330, 0.0
        %v335 = vmax.f32 %v331, 0.0
        %v336 = vmax.f32 %v332, 0.0
        %337 = vst [vmem:[%s176] sm:$0xff] %v333
        %338 = vst [vmem:[%s176 + $0x8] sm:$0xff] %v334
        %339 = vst [vmem:[%s176 + $0x10] sm:$0xff] %v335
        %340 = vst [vmem:[%s176 + $0x18] sm:$0xff] %v336
        %s341 = scalar_lea.vmem [#allocation5], 288
        %v342 = vld [vmem:[%s341] sm:$0xff]
        %v343 = vld [vmem:[%s341 + $0x8] sm:$0xff]
        %v344 = vld [vmem:[%s341 + $0x10] sm:$0xff]
        %v345 = vld [vmem:[%s341 + $0x18] sm:$0xff]
        %v346 = vmul.f32 %v177, %v342
        %v347 = vmul.f32 %v178, %v343
        %v348 = vmul.f32 %v179, %v344
        %v349 = vmul.f32 %v180, %v345
        %s350 = scalar_lea.vmem [#allocation5], 320
        %v351 = vld [vmem:[%s350] sm:$0xff]
        %v352 = vld [vmem:[%s350 + $0x8] sm:$0xff]
        %v353 = vld [vmem:[%s350 + $0x10] sm:$0xff]
        %v354 = vld [vmem:[%s350 + $0x18] sm:$0xff]
        %v355 = vmul.f32 %v182, %v351
        %v356 = vmul.f32 %v183, %v352
        %v357 = vmul.f32 %v184, %v353
        %v358 = vmul.f32 %v185, %v354
        %s359 = scalar_lea.vmem [#allocation5], 352
        %v360 = vld [vmem:[%s359] sm:$0xff]
        %v361 = vld [vmem:[%s359 + $0x8] sm:$0xff]
        %v362 = vld [vmem:[%s359 + $0x10] sm:$0xff]
        %v363 = vld [vmem:[%s359 + $0x18] sm:$0xff]
        %v364 = vmul.f32 %v187, %v360
        %v365 = vmul.f32 %v188, %v361
        %v366 = vmul.f32 %v189, %v362
        %v367 = vmul.f32 %v190, %v363
        %v368 = vadd.f32 %v346, %v364
        %v369 = vadd.f32 %v347, %v365
        %v370 = vadd.f32 %v348, %v366
        %v371 = vadd.f32 %v349, %v367
        %s372 = scalar_lea.vmem [#allocation5], 384
        %v373 = vld [vmem:[%s372] sm:$0xff]
        %v374 = vld [vmem:[%s372 + $0x8] sm:$0xff]
        %v375 = vld [vmem:[%s372 + $0x10] sm:$0xff]
        %v376 = vld [vmem:[%s372 + $0x18] sm:$0xff]
        %v377 = vmul.f32 %v192, %v373
        %v378 = vmul.f32 %v193, %v374
        %v379 = vmul.f32 %v194, %v375
        %v380 = vmul.f32 %v195, %v376
        %v381 = vadd.f32 %v355, %v377
        %v382 = vadd.f32 %v356, %v378
        %v383 = vadd.f32 %v357, %v379
        %v384 = vadd.f32 %v358, %v380
        %s385 = scalar_lea.vmem [#allocation5], 416
        %v386 = vld [vmem:[%s385] sm:$0xff]
        %v387 = vld [vmem:[%s385 + $0x8] sm:$0xff]
        %v388 = vld [vmem:[%s385 + $0x10] sm:$0xff]
        %v389 = vld [vmem:[%s385 + $0x18] sm:$0xff]
        %v390 = vmul.f32 %v197, %v386
        %v391 = vmul.f32 %v198, %v387
        %v392 = vmul.f32 %v199, %v388
        %v393 = vmul.f32 %v200, %v389
        %v394 = vadd.f32 %v368, %v390
        %v395 = vadd.f32 %v369, %v391
        %v396 = vadd.f32 %v370, %v392
        %v397 = vadd.f32 %v371, %v393
        %s398 = scalar_lea.vmem [#allocation5], 448
        %v399 = vld [vmem:[%s398] sm:$0xff]
        %v400 = vld [vmem:[%s398 + $0x8] sm:$0xff]
        %v401 = vld [vmem:[%s398 + $0x10] sm:$0xff]
        %v402 = vld [vmem:[%s398 + $0x18] sm:$0xff]
        %v403 = vmul.f32 %v202, %v399
        %v404 = vmul.f32 %v203, %v400
        %v405 = vmul.f32 %v204, %v401
        %v406 = vmul.f32 %v205, %v402
        %v407 = vadd.f32 %v381, %v403
        %v408 = vadd.f32 %v382, %v404
        %v409 = vadd.f32 %v383, %v405
        %v410 = vadd.f32 %v384, %v406
        %s411 = scalar_lea.vmem [#allocation5], 480
        %v412 = vld [vmem:[%s411] sm:$0xff]
        %v413 = vld [vmem:[%s411 + $0x8] sm:$0xff]
        %v414 = vld [vmem:[%s411 + $0x10] sm:$0xff]
        %v415 = vld [vmem:[%s411 + $0x18] sm:$0xff]
        %v416 = vmul.f32 %v207, %v412
        %v417 = vmul.f32 %v208, %v413
        %v418 = vmul.f32 %v209, %v414
        %v419 = vmul.f32 %v210, %v415
        %v420 = vadd.f32 %v394, %v416
        %v421 = vadd.f32 %v395, %v417
        %v422 = vadd.f32 %v396, %v418
        %v423 = vadd.f32 %v397, %v419
        %s424 = scalar_lea.vmem [#allocation5], 512
        %v425 = vld [vmem:[%s424] sm:$0xff]
        %v426 = vld [vmem:[%s424 + $0x8] sm:$0xff]
        %v427 = vld [vmem:[%s424 + $0x10] sm:$0xff]
        %v428 = vld [vmem:[%s424 + $0x18] sm:$0xff]
        %v429 = vmul.f32 %v212, %v425
        %v430 = vmul.f32 %v213, %v426
        %v431 = vmul.f32 %v214, %v427
        %v432 = vmul.f32 %v215, %v428
        %v433 = vadd.f32 %v407, %v429
        %v434 = vadd.f32 %v408, %v430
        %v435 = vadd.f32 %v409, %v431
        %v436 = vadd.f32 %v410, %v432
        %s437 = scalar_lea.vmem [#allocation5], 544
        %v438 = vld [vmem:[%s437] sm:$0xff]
        %v439 = vld [vmem:[%s437 + $0x8] sm:$0xff]
        %v440 = vld [vmem:[%s437 + $0x10] sm:$0xff]
        %v441 = vld [vmem:[%s437 + $0x18] sm:$0xff]
        %v442 = vmul.f32 %v217, %v438
        %v443 = vmul.f32 %v218, %v439
        %v444 = vmul.f32 %v219, %v440
        %v445 = vmul.f32 %v220, %v441
        %v446 = vadd.f32 %v420, %v442
        %v447 = vadd.f32 %v421, %v443
        %v448 = vadd.f32 %v422, %v444
        %v449 = vadd.f32 %v423, %v445
        %v450 = vadd.f32 %v446, %v433
        %v451 = vadd.f32 %v447, %v434
        %v452 = vadd.f32 %v448, %v435
        %v453 = vadd.f32 %v449, %v436
        %v454 = vmax.f32 %v450, 0.0
        %v455 = vmax.f32 %v451, 0.0
        %v456 = vmax.f32 %v452, 0.0
        %v457 = vmax.f32 %v453, 0.0
        %s458 = scalar_lea.vmem %s176, 32 [#allocation7]
        %459 = vst [vmem:[%s458] sm:$0xff] %v454
        %460 = vst [vmem:[%s458 + $0x8] sm:$0xff] %v455
        %461 = vst [vmem:[%s458 + $0x10] sm:$0xff] %v456
        %462 = vst [vmem:[%s458 + $0x18] sm:$0xff] %v457
        %s463 = scalar_lea.vmem [#allocation5], 576
        %v464 = vld [vmem:[%s463] sm:$0xff]
        %v465 = vld [vmem:[%s463 + $0x8] sm:$0xff]
        %v466 = vld [vmem:[%s463 + $0x10] sm:$0xff]
        %v467 = vld [vmem:[%s463 + $0x18] sm:$0xff]
        %v468 = vmul.f32 %v177, %v464
        %v469 = vmul.f32 %v178, %v465
        %v470 = vmul.f32 %v179, %v466
        %v471 = vmul.f32 %v180, %v467
        %s472 = scalar_lea.vmem [#allocation5], 608
        %v473 = vld [vmem:[%s472] sm:$0xff]
        %v474 = vld [vmem:[%s472 + $0x8] sm:$0xff]
        %v475 = vld [vmem:[%s472 + $0x10] sm:$0xff]
        %v476 = vld [vmem:[%s472 + $0x18] sm:$0xff]
        %v477 = vmul.f32 %v182, %v473
        %v478 = vmul.f32 %v183, %v474
        %v479 = vmul.f32 %v184, %v475
        %v480 = vmul.f32 %v185, %v476
        %s481 = scalar_lea.vmem [#allocation5], 640
        %v482 = vld [vmem:[%s481] sm:$0xff]
        %v483 = vld [vmem:[%s481 + $0x8] sm:$0xff]
        %v484 = vld [vmem:[%s481 + $0x10] sm:$0xff]
        %v485 = vld [vmem:[%s481 + $0x18] sm:$0xff]
        %v486 = vmul.f32 %v187, %v482
        %v487 = vmul.f32 %v188, %v483
        %v488 = vmul.f32 %v189, %v484
        %v489 = vmul.f32 %v190, %v485
        %v490 = vadd.f32 %v468, %v486
        %v491 = vadd.f32 %v469, %v487
        %v492 = vadd.f32 %v470, %v488
        %v493 = vadd.f32 %v471, %v489
        %s494 = scalar_lea.vmem [#allocation5], 672
        %v495 = vld [vmem:[%s494] sm:$0xff]
        %v496 = vld [vmem:[%s494 + $0x8] sm:$0xff]
        %v497 = vld [vmem:[%s494 + $0x10] sm:$0xff]
        %v498 = vld [vmem:[%s494 + $0x18] sm:$0xff]
        %v499 = vmul.f32 %v192, %v495
        %v500 = vmul.f32 %v193, %v496
        %v501 = vmul.f32 %v194, %v497
        %v502 = vmul.f32 %v195, %v498
        %v503 = vadd.f32 %v477, %v499
        %v504 = vadd.f32 %v478, %v500
        %v505 = vadd.f32 %v479, %v501
        %v506 = vadd.f32 %v480, %v502
        %s507 = scalar_lea.vmem [#allocation5], 704
        %v508 = vld [vmem:[%s507] sm:$0xff]
        %v509 = vld [vmem:[%s507 + $0x8] sm:$0xff]
        %v510 = vld [vmem:[%s507 + $0x10] sm:$0xff]
        %v511 = vld [vmem:[%s507 + $0x18] sm:$0xff]
        %v512 = vmul.f32 %v197, %v508
        %v513 = vmul.f32 %v198, %v509
        %v514 = vmul.f32 %v199, %v510
        %v515 = vmul.f32 %v200, %v511
        %v516 = vadd.f32 %v490, %v512
        %v517 = vadd.f32 %v491, %v513
        %v518 = vadd.f32 %v492, %v514
        %v519 = vadd.f32 %v493, %v515
        %s520 = scalar_lea.vmem [#allocation5], 736
        %v521 = vld [vmem:[%s520] sm:$0xff]
        %v522 = vld [vmem:[%s520 + $0x8] sm:$0xff]
        %v523 = vld [vmem:[%s520 + $0x10] sm:$0xff]
        %v524 = vld [vmem:[%s520 + $0x18] sm:$0xff]
        %v525 = vmul.f32 %v202, %v521
        %v526 = vmul.f32 %v203, %v522
        %v527 = vmul.f32 %v204, %v523
        %v528 = vmul.f32 %v205, %v524
        %v529 = vadd.f32 %v503, %v525
        %v530 = vadd.f32 %v504, %v526
        %v531 = vadd.f32 %v505, %v527
        %v532 = vadd.f32 %v506, %v528
        %s533 = scalar_lea.vmem [#allocation5], 768
        %v534 = vld [vmem:[%s533] sm:$0xff]
        %v535 = vld [vmem:[%s533 + $0x8] sm:$0xff]
        %v536 = vld [vmem:[%s533 + $0x10] sm:$0xff]
        %v537 = vld [vmem:[%s533 + $0x18] sm:$0xff]
        %v538 = vmul.f32 %v207, %v534
        %v539 = vmul.f32 %v208, %v535
        %v540 = vmul.f32 %v209, %v536
        %v541 = vmul.f32 %v210, %v537
        %v542 = vadd.f32 %v516, %v538
        %v543 = vadd.f32 %v517, %v539
        %v544 = vadd.f32 %v518, %v540
        %v545 = vadd.f32 %v519, %v541
        %s546 = scalar_lea.vmem [#allocation5], 800
        %v547 = vld [vmem:[%s546] sm:$0xff]
        %v548 = vld [vmem:[%s546 + $0x8] sm:$0xff]
        %v549 = vld [vmem:[%s546 + $0x10] sm:$0xff]
        %v550 = vld [vmem:[%s546 + $0x18] sm:$0xff]
        %v551 = vmul.f32 %v212, %v547
        %v552 = vmul.f32 %v213, %v548
        %v553 = vmul.f32 %v214, %v549
        %v554 = vmul.f32 %v215, %v550
        %v555 = vadd.f32 %v529, %v551
        %v556 = vadd.f32 %v530, %v552
        %v557 = vadd.f32 %v531, %v553
        %v558 = vadd.f32 %v532, %v554
        %s559 = scalar_lea.vmem [#allocation5], 832
        %v560 = vld [vmem:[%s559] sm:$0xff]
        %v561 = vld [vmem:[%s559 + $0x8] sm:$0xff]
        %v562 = vld [vmem:[%s559 + $0x10] sm:$0xff]
        %v563 = vld [vmem:[%s559 + $0x18] sm:$0xff]
        %v564 = vmul.f32 %v217, %v560
        %v565 = vmul.f32 %v218, %v561
        %v566 = vmul.f32 %v219, %v562
        %v567 = vmul.f32 %v220, %v563
        %v568 = vadd.f32 %v542, %v564
        %v569 = vadd.f32 %v543, %v565
        %v570 = vadd.f32 %v544, %v566
        %v571 = vadd.f32 %v545, %v567
        %v572 = vadd.f32 %v568, %v555
        %v573 = vadd.f32 %v569, %v556
        %v574 = vadd.f32 %v570, %v557
        %v575 = vadd.f32 %v571, %v558
        %v576 = vmax.f32 %v572, 0.0
        %v577 = vmax.f32 %v573, 0.0
        %v578 = vmax.f32 %v574, 0.0
        %v579 = vmax.f32 %v575, 0.0
        %s580 = scalar_lea.vmem %s176, 64 [#allocation7]
        %581 = vst [vmem:[%s580] sm:$0xff] %v576
        %582 = vst [vmem:[%s580 + $0x8] sm:$0xff] %v577
        %583 = vst [vmem:[%s580 + $0x10] sm:$0xff] %v578
        %584 = vst [vmem:[%s580 + $0x18] sm:$0xff] %v579
        %s585 = scalar_lea.vmem [#allocation5], 864
        %v586 = vld [vmem:[%s585] sm:$0xff]
        %v587 = vld [vmem:[%s585 + $0x8] sm:$0xff]
        %v588 = vld [vmem:[%s585 + $0x10] sm:$0xff]
        %v589 = vld [vmem:[%s585 + $0x18] sm:$0xff]
        %v590 = vmul.f32 %v177, %v586
        %v591 = vmul.f32 %v178, %v587
        %v592 = vmul.f32 %v179, %v588
        %v593 = vmul.f32 %v180, %v589
        %s594 = scalar_lea.vmem [#allocation5], 896
        %v595 = vld [vmem:[%s594] sm:$0xff]
        %v596 = vld [vmem:[%s594 + $0x8] sm:$0xff]
        %v597 = vld [vmem:[%s594 + $0x10] sm:$0xff]
        %v598 = vld [vmem:[%s594 + $0x18] sm:$0xff]
        %v599 = vmul.f32 %v182, %v595
        %v600 = vmul.f32 %v183, %v596
        %v601 = vmul.f32 %v184, %v597
        %v602 = vmul.f32 %v185, %v598
        %s603 = scalar_lea.vmem [#allocation5], 928
        %v604 = vld [vmem:[%s603] sm:$0xff]
        %v605 = vld [vmem:[%s603 + $0x8] sm:$0xff]
        %v606 = vld [vmem:[%s603 + $0x10] sm:$0xff]
        %v607 = vld [vmem:[%s603 + $0x18] sm:$0xff]
        %v608 = vmul.f32 %v187, %v604
        %v609 = vmul.f32 %v188, %v605
        %v610 = vmul.f32 %v189, %v606
        %v611 = vmul.f32 %v190, %v607
        %v612 = vadd.f32 %v590, %v608
        %v613 = vadd.f32 %v591, %v609
        %v614 = vadd.f32 %v592, %v610
        %v615 = vadd.f32 %v593, %v611
        %s616 = scalar_lea.vmem [#allocation5], 960
        %v617 = vld [vmem:[%s616] sm:$0xff]
        %v618 = vld [vmem:[%s616 + $0x8] sm:$0xff]
        %v619 = vld [vmem:[%s616 + $0x10] sm:$0xff]
        %v620 = vld [vmem:[%s616 + $0x18] sm:$0xff]
        %v621 = vmul.f32 %v192, %v617
        %v622 = vmul.f32 %v193, %v618
        %v623 = vmul.f32 %v194, %v619
        %v624 = vmul.f32 %v195, %v620
        %v625 = vadd.f32 %v599, %v621
        %v626 = vadd.f32 %v600, %v622
        %v627 = vadd.f32 %v601, %v623
        %v628 = vadd.f32 %v602, %v624
        %s629 = scalar_lea.vmem [#allocation5], 992
        %v630 = vld [vmem:[%s629] sm:$0xff]
        %v631 = vld [vmem:[%s629 + $0x8] sm:$0xff]
        %v632 = vld [vmem:[%s629 + $0x10] sm:$0xff]
        %v633 = vld [vmem:[%s629 + $0x18] sm:$0xff]
        %v634 = vmul.f32 %v197, %v630
        %v635 = vmul.f32 %v198, %v631
        %v636 = vmul.f32 %v199, %v632
        %v637 = vmul.f32 %v200, %v633
        %v638 = vadd.f32 %v612, %v634
        %v639 = vadd.f32 %v613, %v635
        %v640 = vadd.f32 %v614, %v636
        %v641 = vadd.f32 %v615, %v637
        %s642 = scalar_lea.vmem [#allocation5], 1024
        %v643 = vld [vmem:[%s642] sm:$0xff]
        %v644 = vld [vmem:[%s642 + $0x8] sm:$0xff]
        %v645 = vld [vmem:[%s642 + $0x10] sm:$0xff]
        %v646 = vld [vmem:[%s642 + $0x18] sm:$0xff]
        %v647 = vmul.f32 %v202, %v643
        %v648 = vmul.f32 %v203, %v644
        %v649 = vmul.f32 %v204, %v645
        %v650 = vmul.f32 %v205, %v646
        %v651 = vadd.f32 %v625, %v647
        %v652 = vadd.f32 %v626, %v648
        %v653 = vadd.f32 %v627, %v649
        %v654 = vadd.f32 %v628, %v650
        %s655 = scalar_lea.vmem [#allocation5], 1056
        %v656 = vld [vmem:[%s655] sm:$0xff]
        %v657 = vld [vmem:[%s655 + $0x8] sm:$0xff]
        %v658 = vld [vmem:[%s655 + $0x10] sm:$0xff]
        %v659 = vld [vmem:[%s655 + $0x18] sm:$0xff]
        %v660 = vmul.f32 %v207, %v656
        %v661 = vmul.f32 %v208, %v657
        %v662 = vmul.f32 %v209, %v658
        %v663 = vmul.f32 %v210, %v659
        %v664 = vadd.f32 %v638, %v660
        %v665 = vadd.f32 %v639, %v661
        %v666 = vadd.f32 %v640, %v662
        %v667 = vadd.f32 %v641, %v663
        %s668 = scalar_lea.vmem [#allocation5], 1088
        %v669 = vld [vmem:[%s668] sm:$0xff]
        %v670 = vld [vmem:[%s668 + $0x8] sm:$0xff]
        %v671 = vld [vmem:[%s668 + $0x10] sm:$0xff]
        %v672 = vld [vmem:[%s668 + $0x18] sm:$0xff]
        %v673 = vmul.f32 %v212, %v669
        %v674 = vmul.f32 %v213, %v670
        %v675 = vmul.f32 %v214, %v671
        %v676 = vmul.f32 %v215, %v672
        %v677 = vadd.f32 %v651, %v673
        %v678 = vadd.f32 %v652, %v674
        %v679 = vadd.f32 %v653, %v675
        %v680 = vadd.f32 %v654, %v676
        %s681 = scalar_lea.vmem [#allocation5], 1120
        %v682 = vld [vmem:[%s681] sm:$0xff]
        %v683 = vld [vmem:[%s681 + $0x8] sm:$0xff]
        %v684 = vld [vmem:[%s681 + $0x10] sm:$0xff]
        %v685 = vld [vmem:[%s681 + $0x18] sm:$0xff]
        %v686 = vmul.f32 %v217, %v682
        %v687 = vmul.f32 %v218, %v683
        %v688 = vmul.f32 %v219, %v684
        %v689 = vmul.f32 %v220, %v685
        %v690 = vadd.f32 %v664, %v686
        %v691 = vadd.f32 %v665, %v687
        %v692 = vadd.f32 %v666, %v688
        %v693 = vadd.f32 %v667, %v689
        %v694 = vadd.f32 %v690, %v677
        %v695 = vadd.f32 %v691, %v678
        %v696 = vadd.f32 %v692, %v679
        %v697 = vadd.f32 %v693, %v680
        %v698 = vmax.f32 %v694, 0.0
        %v699 = vmax.f32 %v695, 0.0
        %v700 = vmax.f32 %v696, 0.0
        %v701 = vmax.f32 %v697, 0.0
        %s702 = scalar_lea.vmem %s176, 96 [#allocation7]
        %703 = vst [vmem:[%s702] sm:$0xff] %v698
        %704 = vst [vmem:[%s702 + $0x8] sm:$0xff] %v699
        %705 = vst [vmem:[%s702 + $0x10] sm:$0xff] %v700
        %706 = vst [vmem:[%s702 + $0x18] sm:$0xff] %v701
        %s707 = sand.u32 %s75, 1
        %s708 = scalar_lea.sflag [#allocation4], %s707
        %s709 = sand.u32 %s75, 1
        %s710 = smul.addr %s709, 128
        %s711 = scalar_lea.vmem [#allocation7], %s710
        // Predicated region
        $region37: #{tpu_custom_call.1} parent=27 // pred_check
          %p712 = pneg %p85
        $region38: #{tpu_custom_call.1} parent=27 // pred_check_branch
          %714 = sbr.rel (%p712) target = $region40
        $region39: #{tpu_custom_call.1} parent=27 // pred_region
          %s716 = ssub.s32 2048, 2048
          %717 = vsyncadd %s708, %s716
          %s718 = smul.addr %s20, 16
          %s719 = smul.addr %s718, 128
          %s720 = scalar_lea.hbm %s2, %s719
          %s721 = sshll.u32 %s711, 4
          %s722 = int_to_ptr.vmem [resolvable:$true] %s721
          %727 = dma.vmem_to_hbm [thread:$0]  %s722, 2048, %s720, %s708, 256, 256, 16
        $region40: #{tpu_custom_call.1} parent=27 // pred_fallthru
          _
      $region28: #{tpu_custom_call.1} parent=5 // pred_fallthru
        _
      %p728 = scmp.le.s32.totalorder 2, %s15
      // Predicated region
      $region41: #{tpu_custom_call.1} parent=5 // pred_check
        %p729 = pneg %p728
      $region42: #{tpu_custom_call.1} parent=5 // pred_check_branch
        %731 = sbr.rel (%p729) target = $region44
      $region43: #{tpu_custom_call.1} parent=5 // pred_region
        %s732 = ssub.s32 %s15, 2
        // Predicated region
        $region45: #{tpu_custom_call.1} parent=43 // pred_check
          %p733 = pneg %p91
        $region46: #{tpu_custom_call.1} parent=43 // pred_check_branch
          %735 = sbr.rel (%p733) target = $region48
        $region47: #{tpu_custom_call.1} parent=43 // pred_region
          %s736 = sand.u32 %s76, 1
          %s737 = scalar_lea.sflag [#allocation4], %s736
          %s738 = sand.u32 %s76, 1
          %s739 = smul.addr %s738, 128
          %s740 = scalar_lea.vmem [#allocation7], %s739
          %741 = dma.done %s737, 2048
        $region48: #{tpu_custom_call.1} parent=43 // pred_fallthru
          _
      $region44: #{tpu_custom_call.1} parent=5 // pred_fallthru
        _
    $region6: #{tpu_custom_call.1} parent=1 // loop_footer
      %s19 = sadd.s32 1, %s15
    $region7: #{tpu_custom_call.1} parent=1 // loop_footer_branch
      %14 = sbr.rel target = $region3
    $region8: #{tpu_custom_call.1} parent=1 // loop_exit
      _
    %742 = vsyncpa [#allocation3], 1
    %s743 = scalar_lea.sflag [#allocation3], 1
    %744 = vsyncpa %s743, 1
    %745 = vsyncpa [#allocation6], 1
    %746 = vsyncpa [#allocation4], 1
    %s747 = scalar_lea.sflag [#allocation4], 1
    %748 = vsyncpa %s747, 1

</llo_original>
